<compile_context>
chip_gen: v6e
topology: v6e:2x2x1
jax: 0.10.0
libtpu: 0.0.40
codegen_flags: <defaults>
</compile_context>

<pallas_src>
import functools

import numpy as np
import jax
import jax.numpy as jnp
from jax import lax
from jax.experimental import pallas as pl
from jax.experimental.pallas import tpu as pltpu


_COMPILER = pltpu.CompilerParams(
    dimension_semantics=("parallel",),
    vmem_limit_bytes=32 * 1024 * 1024,
)


# ----------------------------- host-side helpers ----------------------------
def _interp_matrix(n_in, n_out):
    # nn.Upsample(scale_factor=2, mode='bilinear', align_corners=True):
    # src = dst * (n_in - 1) / (n_out - 1)
    if n_in == 1:
        return jnp.ones((n_out, 1), jnp.float32)
    s = jnp.arange(n_out, dtype=jnp.float32) * ((n_in - 1) / (n_out - 1))
    lo = jnp.clip(jnp.floor(s).astype(jnp.int32), 0, n_in - 2)
    w = s - lo.astype(jnp.float32)
    eye = jnp.eye(n_in, dtype=jnp.float32)
    return eye[lo] * (1.0 - w)[:, None] + eye[lo + 1] * w[:, None]


def _pad_flatten_bf16(x_nchw):
    # (B, C, H, W) -> (B, C, (H+2)*(W+2) + 2) bf16: zero-padded image, row-major
    # flattened, plus 2 guard lanes so the largest conv-tap slice stays in bounds.
    B, C, H, W = x_nchw.shape
    xp = jnp.pad(x_nchw, ((0, 0), (0, 0), (1, 1), (1, 1)))
    xp = xp.reshape(B, C, (H + 2) * (W + 2))
    xp = jnp.pad(xp, ((0, 0), (0, 0), (0, 2)))
    return xp.astype(jnp.bfloat16)


def _w_taps(w):
    # (Cout, Cin, 3, 3) -> (9, Cout, Cin) bf16, tap index k = dy*3 + dx
    co, ci = w.shape[0], w.shape[1]
    return jnp.transpose(w, (2, 3, 0, 1)).reshape(9, co, ci).astype(jnp.bfloat16)


# -------------------------------- kernels ----------------------------------
def _upsample_kernel(x_ref, lwt_ref, lh_ref, o_ref, *, cx, h0, h):
    # Separable bilinear 2x (align_corners=True):
    #   width interp: one lane-dense matmul over all channels,
    #   height interp: small per-channel matmul, stored directly into o_ref slices
    #   (sublane offsets c*h are multiples of 8 -> aligned stores, no concat relayout).
    t = jnp.dot(x_ref[0], lwt_ref[...], preferred_element_type=jnp.float32)   # (cx*h0, Wout)
    lh = lh_ref[...]                                                          # (h, h0)
    for c in range(cx):
        o_ref[0, c * h:(c + 1) * h, :] = jnp.dot(
            lh, t[c * h0:(c + 1) * h0, :],
            preferred_element_type=jnp.float32).astype(o_ref.dtype)


def _fused_up_block_kernel(x_ref, w1_ref, w2_ref, w3_ref, w4_ref, mask_ref, emb_ref,
                           o_ref, p1_ref, p2_ref, p3_ref, *, H, W):
    Wp = W + 2
    Nint = H * Wp
    mask = mask_ref[...]                                   # (1, Nint) f32, 0 on wrap columns

    def conv3x3(xp, w_ref):
        # xp: (Cin, Nppx) bf16 zero-padded flattened image (+2 guard lanes).
        # 3x3 conv = 9 accumulating MXU matmuls against lane-shifted views (in-kernel im2col).
        acc = None
        for dy in range(3):
            for dx in range(3):
                off = dy * Wp + dx
                s = xp[:, off:off + Nint]                  # (Cin, Nint) bf16
                y = jnp.dot(w_ref[dy * 3 + dx], s,         # (Cout, Cin) @ (Cin, Nint)
                            preferred_element_type=jnp.float32)
                acc = y if acc is None else acc + y
        return acc                                         # (Cout, Nint) f32

    def gelu(v):                                           # tanh-GELU: tanh runs on the EUP
        c = np.float32(0.7978845608028654)                 # sqrt(2/pi)
        return 0.5 * v * (1.0 + jnp.tanh(c * (v + np.float32(0.044715) * v * v * v)))

    def repad(buf_ref, win_f32):
        # Re-establish zero padding for the next conv: zeros everywhere, masked interior.
        buf_ref[...] = jnp.zeros_like(buf_ref)
        buf_ref[:, Wp + 1: Wp + 1 + Nint] = (win_f32 * mask).astype(buf_ref.dtype)

    x0 = x_ref[0]                                          # (Cin, Nppx) bf16
    # DoubleConv(in, in, residual=True): gelu(x + conv2(gelu(conv1(x))))
    h1 = gelu(conv3x3(x0, w1_ref))
    repad(p1_ref, h1)
    h2 = conv3x3(p1_ref[...], w2_ref)
    res = x0[:, Wp + 1: Wp + 1 + Nint].astype(jnp.float32)
    d1 = gelu(res + h2)
    repad(p2_ref, d1)
    # DoubleConv(in, out, mid=in//2): conv4(gelu(conv3(x)))
    h3 = gelu(conv3x3(p2_ref[...], w3_ref))
    repad(p3_ref, h3)
    h4 = conv3x3(p3_ref[...], w4_ref)                      # (Cout, Nint) f32
    o_ref[0] = (h4 + emb_ref[0]).astype(o_ref.dtype)       # emb (Cout, 1) broadcasts over lanes


# ------------------------------ pallas wrappers ------------------------------
def upsample2x_bilinear_ac(x_nchw):
    B, C, H0, W0 = x_nchw.shape
    H, W = 2 * H0, 2 * W0
    lh = _interp_matrix(H0, H)                  # (H, H0)
    lwt = _interp_matrix(W0, W).T               # (W0, W)
    xf = x_nchw.reshape(B, C * H0, W0).astype(jnp.float32)
    out = pl.pallas_call(
        functools.partial(_upsample_kernel, cx=C, h0=H0, h=H),
        out_shape=jax.ShapeDtypeStruct((B, C * H, W), jnp.float32),
        grid=(B,),
        in_specs=[pl.BlockSpec((1, C * H0, W0), lambda b: (b, 0, 0)),
                  pl.BlockSpec((W0, W), lambda b: (0, 0)),
                  pl.BlockSpec((H, H0), lambda b: (0, 0))],
        out_specs=pl.BlockSpec((1, C * H, W), lambda b: (b, 0, 0)),
        compiler_params=_COMPILER,
    )(xf, lwt, lh)
    return out.reshape(B, C, H, W)


def fused_conv_chain(xcp, w1, w2, w3, w4, emb3, H, W):
    # xcp: (B, Cin, Nppx) bf16 padded input; w*: (9, Co, Ci) bf16; emb3: (B, Cout, 1) f32
    B, Cin, Nppx = xcp.shape
    Wp = W + 2
    Nint = H * Wp
    Cmid = w3.shape[1]
    Cout = w4.shape[1]
    mask = (jnp.arange(Nint) % Wp < W).astype(jnp.float32).reshape(1, Nint)

    def full(shape):
        return pl.BlockSpec(shape, lambda b, _n=len(shape): (0,) * _n)

    out = pl.pallas_call(
        functools.partial(_fused_up_block_kernel, H=H, W=W),
        out_shape=jax.ShapeDtypeStruct((B, Cout, Nint), jnp.float32),
        grid=(B,),
        in_specs=[
            pl.BlockSpec((1, Cin, Nppx), lambda b: (b, 0, 0)),
            full(w1.shape), full(w2.shape), full(w3.shape), full(w4.shape),
            full(mask.shape),
            pl.BlockSpec((1, Cout, 1), lambda b: (b, 0, 0)),
        ],
        out_specs=pl.BlockSpec((1, Cout, Nint), lambda b: (b, 0, 0)),
        scratch_shapes=[
            pltpu.VMEM((Cin, Nppx), jnp.bfloat16),
            pltpu.VMEM((Cin, Nppx), jnp.bfloat16),
            pltpu.VMEM((Cmid, Nppx), jnp.bfloat16),
        ],
        compiler_params=_COMPILER,
    )(xcp, w1, w2, w3, w4, mask, emb3)
    return out


# --------------------------- full accomp_Up forward --------------------------
def accomp_up_forward(params, x, skip_x, accompany_x, t):
    """x, skip_x, accompany_x: NCHW float32; t: (B, emb_dim). Returns NCHW."""
    x = x.astype(jnp.float32)
    skip_x = skip_x.astype(jnp.float32)
    accompany_x = accompany_x.astype(jnp.float32)

    xu = upsample2x_bilinear_ac(x)                                         # (B, Cx, H, W)
    xc = jnp.concatenate([skip_x, xu, accompany_x], axis=1)                # (B, Cin, H, W)
    B, Cin, H, W = xc.shape

    xcp = _pad_flatten_bf16(xc)                                            # (B, Cin, Nppx) bf16
    w1 = _w_taps(params["w1"]); w2 = _w_taps(params["w2"])
    w3 = _w_taps(params["w3"]); w4 = _w_taps(params["w4"])

    # Tiny time-embedding MLP precomputed with XLA (avoids a degenerate 1-row MXU push).
    emb = (jax.nn.silu(t.astype(jnp.float32)) @ params["w_emb"].T.astype(jnp.float32)
           + params["b_emb"].astype(jnp.float32))                          # (B, Cout)
    Cout = emb.shape[-1]
    emb3 = emb.reshape(B, Cout, 1)

    out_win = fused_conv_chain(xcp, w1, w2, w3, w4, emb3, H, W)            # (B, Cout, H*(W+2))
    out = out_win.reshape(B, Cout, H, W + 2)[:, :, :, :W]                  # drop wrap columns
    return out


# ----------------------------- pure-JAX reference ----------------------------
def reference_forward(params, x, skip_x, accompany_x, t):
    B, C, H, W = x.shape
    Lh = _interp_matrix(H, 2 * H)
    Lw = _interp_matrix(W, 2 * W)
    xu = jnp.einsum('ph,bchw,qw->bcpq', Lh, x, Lw)
    xc = jnp.concatenate([skip_x, xu, accompany_x], axis=1)

    def conv(z, w):
        return lax.conv_general_dilated(z, w, (1, 1), ((1, 1), (1, 1)),
                                        dimension_numbers=('NCHW', 'OIHW', 'NCHW'),
                                        precision=lax.Precision.HIGHEST)

    g = lambda v: jax.nn.gelu(v, approximate=False)   # exact GELU (PyTorch default)
    d1 = g(xc + conv(g(conv(xc, params["w1"])), params["w2"]))
    h2 = conv(g(conv(d1, params["w3"])), params["w4"])
    emb = jax.nn.silu(t) @ params["w_emb"].T + params["b_emb"]
    return h2 + emb[:, :, None, None]


if __name__ == "__main__":
    key = jax.random.PRNGKey(0)
    B = 2
    Cx, Cskip, Cacc = 4, 2, 2
    in_channels = Cskip + Cx + Cacc        # 8 (channels after concat)
    out_channels = 4
    mid2 = in_channels // 2                # 4
    emb_dim = 32
    H = W = 8                              # x gets upsampled to 16x16

    ks = jax.random.split(key, 10)
    x = jax.random.normal(ks[0], (B, Cx, H, W), jnp.float32)
    skip_x = jax.random.normal(ks[1], (B, Cskip, 2 * H, 2 * W), jnp.float32)
    accompany_x = jax.random.normal(ks[2], (B, Cacc, 2 * H, 2 * W), jnp.float32)
    t = jax.random.normal(ks[3], (B, emb_dim), jnp.float32)

    params = {
        "w1": 0.1 * jax.random.normal(ks[4], (in_channels, in_channels, 3, 3), jnp.float32),
        "w2": 0.1 * jax.random.normal(ks[5], (in_channels, in_channels, 3, 3), jnp.float32),
        "w3": 0.1 * jax.random.normal(ks[6], (mid2, in_channels, 3, 3), jnp.float32),
        "w4": 0.1 * jax.random.normal(ks[7], (out_channels, mid2, 3, 3), jnp.float32),
        "w_emb": 0.1 * jax.random.normal(ks[8], (out_channels, emb_dim), jnp.float32),
        "b_emb": 0.1 * jax.random.normal(ks[9], (out_channels,), jnp.float32),
    }

    out = jax.block_until_ready(accomp_up_forward(params, x, skip_x, accompany_x, t))
    ref = jax.block_until_ready(reference_forward(params, x, skip_x, accompany_x, t))
    assert out.shape == (B, out_channels, 2 * H, 2 * W), out.shape
    err = float(jnp.max(jnp.abs(out - ref)))
    # TODO(synk): kernel uses tanh-GELU (EUP) vs PyTorch exact erf-GELU -> ~1e-3 level
    # deviation amplified slightly through the conv chain; erf has no guaranteed Mosaic
    # lowering, so we keep the tanh form and a 5e-2 tolerance.
    assert err < 5e-2, f"max abs err {err}"
    print("KERNEL_OK")
</pallas_src>

<mosaic_0001>
module attributes {stable_mosaic.version = 11 : i64} {
  func.func @_upsample_kernel(%arg0: i32, %arg1: memref<1x32x8xf32, #tpu.memory_space<vmem>>, %arg2: memref<8x16xf32, #tpu.memory_space<vmem>>, %arg3: memref<16x8xf32, #tpu.memory_space<vmem>>, %arg4: memref<1x64x16xf32, #tpu.memory_space<vmem>>) attributes {dimension_semantics = [#tpu.dimension_semantics<parallel>], iteration_bounds = array<i64: 2>, scalar_prefetch = 0 : i64, scratch_operands = 0 : i64, tpu.core_type = #tpu.core_type<tc>, window_params = [{transform_indices = @transform_0, window_bounds = array<i64: 1, 32, 8>}, {pipeline_mode = #tpu.pipeline_mode<synchronous>, transform_indices = @transform_1, window_bounds = array<i64: 8, 16>}, {pipeline_mode = #tpu.pipeline_mode<synchronous>, transform_indices = @transform_2, window_bounds = array<i64: 16, 8>}, {transform_indices = @transform_3, window_bounds = array<i64: 1, 64, 16>}]} {
    %c0 = arith.constant 0 : index
    %c0_0 = arith.constant 0 : index
    %c0_1 = arith.constant 0 : index
    %0 = vector.load %arg1[%c0, %c0_0, %c0_1] : memref<1x32x8xf32, #tpu.memory_space<vmem>>, vector<1x32x8xf32>
    %1 = vector.shape_cast %0 : vector<1x32x8xf32> to vector<32x8xf32>
    %c0_2 = arith.constant 0 : index
    %c0_3 = arith.constant 0 : index
    %2 = vector.load %arg2[%c0_2, %c0_3] : memref<8x16xf32, #tpu.memory_space<vmem>>, vector<8x16xf32>
    %cst = arith.constant dense<0.000000e+00> : vector<32x16xf32>
    %3 = tpu.matmul %1, %2, %cst {dimension_numbers = #tpu.dot_dimension_numbers<[1], [0], [0], [1], [0, 0, 1, 1], [], []>} : vector<32x8xf32>, vector<8x16xf32>, vector<32x16xf32> -> vector<32x16xf32>
    %c0_4 = arith.constant 0 : index
    %c0_5 = arith.constant 0 : index
    %4 = vector.load %arg3[%c0_4, %c0_5] : memref<16x8xf32, #tpu.memory_space<vmem>>, vector<16x8xf32>
    %5 = vector.extract_strided_slice %3 {offsets = [0, 0], sizes = [8, 16], strides = [1, 1]} : vector<32x16xf32> to vector<8x16xf32>
    %cst_6 = arith.constant dense<0.000000e+00> : vector<16x16xf32>
    %6 = tpu.matmul %4, %5, %cst_6 {dimension_numbers = #tpu.dot_dimension_numbers<[1], [0], [0], [1], [0, 0, 1, 1], [], []>} : vector<16x8xf32>, vector<8x16xf32>, vector<16x16xf32> -> vector<16x16xf32>
    %c0_7 = arith.constant 0 : index
    %c0_8 = arith.constant 0 : index
    %c0_9 = arith.constant 0 : index
    %7 = vector.load %arg4[%c0_7, %c0_8, %c0_9] : memref<1x64x16xf32, #tpu.memory_space<vmem>>, vector<1x16x16xf32>
    %8 = vector.shape_cast %7 : vector<1x16x16xf32> to vector<16x16xf32>
    %9 = vector.shape_cast %6 : vector<16x16xf32> to vector<1x16x16xf32>
    tpu.vector_store %arg4[%c0_7, %c0_8, %c0_9], %9 {strides = array<i32>} : memref<1x64x16xf32, #tpu.memory_space<vmem>>, vector<1x16x16xf32>,
    %10 = vector.extract_strided_slice %3 {offsets = [8, 0], sizes = [8, 16], strides = [1, 1]} : vector<32x16xf32> to vector<8x16xf32>
    %cst_10 = arith.constant dense<0.000000e+00> : vector<16x16xf32>
    %11 = tpu.matmul %4, %10, %cst_10 {dimension_numbers = #tpu.dot_dimension_numbers<[1], [0], [0], [1], [0, 0, 1, 1], [], []>} : vector<16x8xf32>, vector<8x16xf32>, vector<16x16xf32> -> vector<16x16xf32>
    %c0_11 = arith.constant 0 : index
    %c16 = arith.constant 16 : index
    %c0_12 = arith.constant 0 : index
    %12 = vector.load %arg4[%c0_11, %c16, %c0_12] : memref<1x64x16xf32, #tpu.memory_space<vmem>>, vector<1x16x16xf32>
    %13 = vector.shape_cast %12 : vector<1x16x16xf32> to vector<16x16xf32>
    %14 = vector.shape_cast %11 : vector<16x16xf32> to vector<1x16x16xf32>
    tpu.vector_store %arg4[%c0_11, %c16, %c0_12], %14 {strides = array<i32>} : memref<1x64x16xf32, #tpu.memory_space<vmem>>, vector<1x16x16xf32>,
    %15 = vector.extract_strided_slice %3 {offsets = [16, 0], sizes = [8, 16], strides = [1, 1]} : vector<32x16xf32> to vector<8x16xf32>
    %cst_13 = arith.constant dense<0.000000e+00> : vector<16x16xf32>
    %16 = tpu.matmul %4, %15, %cst_13 {dimension_numbers = #tpu.dot_dimension_numbers<[1], [0], [0], [1], [0, 0, 1, 1], [], []>} : vector<16x8xf32>, vector<8x16xf32>, vector<16x16xf32> -> vector<16x16xf32>
    %c0_14 = arith.constant 0 : index
    %c32 = arith.constant 32 : index
    %c0_15 = arith.constant 0 : index
    %17 = vector.load %arg4[%c0_14, %c32, %c0_15] : memref<1x64x16xf32, #tpu.memory_space<vmem>>, vector<1x16x16xf32>
    %18 = vector.shape_cast %17 : vector<1x16x16xf32> to vector<16x16xf32>
    %19 = vector.shape_cast %16 : vector<16x16xf32> to vector<1x16x16xf32>
    tpu.vector_store %arg4[%c0_14, %c32, %c0_15], %19 {strides = array<i32>} : memref<1x64x16xf32, #tpu.memory_space<vmem>>, vector<1x16x16xf32>,
    %20 = vector.extract_strided_slice %3 {offsets = [24, 0], sizes = [8, 16], strides = [1, 1]} : vector<32x16xf32> to vector<8x16xf32>
    %cst_16 = arith.constant dense<0.000000e+00> : vector<16x16xf32>
    %21 = tpu.matmul %4, %20, %cst_16 {dimension_numbers = #tpu.dot_dimension_numbers<[1], [0], [0], [1], [0, 0, 1, 1], [], []>} : vector<16x8xf32>, vector<8x16xf32>, vector<16x16xf32> -> vector<16x16xf32>
    %c0_17 = arith.constant 0 : index
    %c48 = arith.constant 48 : index
    %c0_18 = arith.constant 0 : index
    %22 = vector.load %arg4[%c0_17, %c48, %c0_18] : memref<1x64x16xf32, #tpu.memory_space<vmem>>, vector<1x16x16xf32>
    %23 = vector.shape_cast %22 : vector<1x16x16xf32> to vector<16x16xf32>
    %24 = vector.shape_cast %21 : vector<16x16xf32> to vector<1x16x16xf32>
    tpu.vector_store %arg4[%c0_17, %c48, %c0_18], %24 {strides = array<i32>} : memref<1x64x16xf32, #tpu.memory_space<vmem>>, vector<1x16x16xf32>,
    return
  }
  func.func @transform_0(%arg0: i32) -> (i32, i32, i32) {
    %c0_i32 = arith.constant 0 : i32
    %c0_i32_0 = arith.constant 0 : i32
    %c0_i32_1 = arith.constant 0 : i32
    return %arg0, %c0_i32, %c0_i32_0 : i32, i32, i32
  }
  func.func @transform_1(%arg0: i32) -> (i32, i32) {
    %c0_i32 = arith.constant 0 : i32
    %c0_i32_0 = arith.constant 0 : i32
    %c0_i32_1 = arith.constant 0 : i32
    return %c0_i32, %c0_i32_0 : i32, i32
  }
  func.func @transform_2(%arg0: i32) -> (i32, i32) {
    %c0_i32 = arith.constant 0 : i32
    %c0_i32_0 = arith.constant 0 : i32
    %c0_i32_1 = arith.constant 0 : i32
    return %c0_i32, %c0_i32_0 : i32, i32
  }
  func.func @transform_3(%arg0: i32) -> (i32, i32, i32) {
    %c0_i32 = arith.constant 0 : i32
    %c0_i32_0 = arith.constant 0 : i32
    %c0_i32_1 = arith.constant 0 : i32
    return %arg0, %c0_i32, %c0_i32_0 : i32, i32, i32
  }
}

</mosaic_0001>

<llo_original>
// kernel: tpu_custom_call.1
$region0: #{tpu_custom_call.1}
  #allocation0 [shape = 'u32[]', space=smem, size = 0x4, offset = 0x4, fixed_abs, tag = 'smem constant byte address 0x4 - core index']
  #allocation1 [shape = 'u32[144,128]{1,0:T(1,128)}', space=vmem, size = 0x12000, scoped, tag = 'internal scratch']
  %s0 = inlined_call_operand.vmem [shape: f32[2,32,8], index: 0, kind: input, shape index: {}]
  %s1 = inlined_call_operand.vmem [shape: f32[8,16], index: 1, kind: input, shape index: {}]
  %s2 = inlined_call_operand.vmem [shape: f32[16,8], index: 2, kind: input, shape index: {}]
  %s3 = inlined_call_operand.vmem [shape: f32[2,64,16], index: 3, kind: output, shape index: {}]
  %s4 = sld [smem:[#allocation0]]
  $region45: #{tpu_custom_call.1} parent=0
    _
  %s6 = ssub.s32 1, %s4
  %s7 = scalar_select 0, %s6, %s4
  loop: start=0, step=1, limit=4
  $region2: #{tpu_custom_call.1} parent=0 // loop_pre_header
    _
  $region3: #{tpu_custom_call.1} parent=0 // loop_header
    %s9 = sphi 0, %s13
    %p10 = scmp.ge.s32.totalorder %s9, 4
    %s19 = sphi 0, %s21
    %s22 = sphi 0, %s19
    %s23 = sphi 0, %s22
    %s39 = sphi 0, %s23
    %s43 = sphi 0, %s43
    %s45 = sphi 0, %s43
    %s46 = sphi 0, %s45
    %s60 = sphi 0, %s46
    %s64 = sphi 0, %s64
    %s66 = sphi 0, %s64
    %s67 = sphi 0, %s66
    %s81 = sphi 0, %s67
    %s87 = sphi 0, %s89
    %s90 = sphi 0, %s87
    %s91 = sphi 0, %s90
    %s107 = sphi 0, %s91
  $region4: #{tpu_custom_call.1} parent=0 // loop_header_branch
    %12 = sbr.rel (%p10) target = $region8
  $region5: #{tpu_custom_call.1} parent=0 // loop_body
    %s14 = ssub.s32 %s9, 1
    %s15 = ssub.s32 %s9, 2
    %s16 = sadd.s32 %s9, 1
    %s17 = ssub.s32 %s9, %s16
    %p18 = scmp.eq.s32.totalorder %s17, 0
    %s20 = sadd.s32 %s19, 1
    %s21 = scalar_select %p18, %s19, %s20
    %p24 = pneg %p18
    %p25 = scmp.eq.s32.totalorder %s9, 1
    %p26 = por %p24, %p25
    %p27 = scmp.ne.s32.totalorder %s19, %s22
    %p28 = scmp.eq.s32.totalorder %s9, 0
    %p29 = por %p27, %p28
    %p30 = scmp.ne.s32.totalorder %s19, %s22
    %p31 = scmp.eq.s32.totalorder %s14, 1
    %p32 = por %p30, %p31
    %p33 = scmp.ne.s32.totalorder %s22, %s23
    %p34 = scmp.eq.s32.totalorder %s14, 0
    %p35 = por %p33, %p34
    %p36 = scmp.ne.s32.totalorder %s22, %s23
    %p37 = scmp.eq.s32.totalorder %s15, 1
    %p38 = por %p36, %p37
    %p40 = scmp.ne.s32.totalorder %s23, %s39
    %p41 = scmp.eq.s32.totalorder %s15, 0
    %p42 = por %p40, %p41
    %s44 = sadd.s32 %s43, 1
    %p47 = scmp.eq.s32.totalorder %s9, 1
    %p48 = scmp.ne.s32.totalorder %s43, %s45
    %p49 = scmp.eq.s32.totalorder %s9, 0
    %p50 = por %p48, %p49
    %p51 = scmp.ne.s32.totalorder %s43, %s45
    %p52 = scmp.eq.s32.totalorder %s14, 1
    %p53 = por %p51, %p52
    %p54 = scmp.ne.s32.totalorder %s45, %s46
    %p55 = scmp.eq.s32.totalorder %s14, 0
    %p56 = por %p54, %p55
    %p57 = scmp.ne.s32.totalorder %s45, %s46
    %p58 = scmp.eq.s32.totalorder %s15, 1
    %p59 = por %p57, %p58
    %p61 = scmp.ne.s32.totalorder %s46, %s60
    %p62 = scmp.eq.s32.totalorder %s15, 0
    %p63 = por %p61, %p62
    %s65 = sadd.s32 %s64, 1
    %p68 = scmp.eq.s32.totalorder %s9, 1
    %p69 = scmp.ne.s32.totalorder %s64, %s66
    %p70 = scmp.eq.s32.totalorder %s9, 0
    %p71 = por %p69, %p70
    %p72 = scmp.ne.s32.totalorder %s64, %s66
    %p73 = scmp.eq.s32.totalorder %s14, 1
    %p74 = por %p72, %p73
    %p75 = scmp.ne.s32.totalorder %s66, %s67
    %p76 = scmp.eq.s32.totalorder %s14, 0
    %p77 = por %p75, %p76
    %p78 = scmp.ne.s32.totalorder %s66, %s67
    %p79 = scmp.eq.s32.totalorder %s15, 1
    %p80 = por %p78, %p79
    %p82 = scmp.ne.s32.totalorder %s67, %s81
    %p83 = scmp.eq.s32.totalorder %s15, 0
    %p84 = por %p82, %p83
    %s85 = ssub.s32 %s9, %s16
    %p86 = scmp.eq.s32.totalorder %s85, 0
    %s88 = sadd.s32 %s87, 1
    %s89 = scalar_select %p86, %s87, %s88
    %p92 = pneg %p86
    %p93 = scmp.eq.s32.totalorder %s9, 1
    %p94 = por %p92, %p93
    %p95 = scmp.ne.s32.totalorder %s87, %s90
    %p96 = scmp.eq.s32.totalorder %s9, 0
    %p97 = por %p95, %p96
    %p98 = scmp.ne.s32.totalorder %s87, %s90
    %p99 = scmp.eq.s32.totalorder %s14, 1
    %p100 = por %p98, %p99
    %p101 = scmp.ne.s32.totalorder %s90, %s91
    %p102 = scmp.eq.s32.totalorder %s14, 0
    %p103 = por %p101, %p102
    %p104 = scmp.ne.s32.totalorder %s90, %s91
    %p105 = scmp.eq.s32.totalorder %s15, 1
    %p106 = por %p104, %p105
    %p108 = scmp.ne.s32.totalorder %s91, %s107
    %p109 = scmp.eq.s32.totalorder %s15, 0
    %p110 = por %p108, %p109
    %p111 = scmp.le.s32.totalorder 1, %s9
    %p112 = scmp.lt.s32.totalorder %s9, 3
    %p113 = pnand %p111, %p112
    %p114 = pneg %p113
    // Predicated region
    $region9: #{tpu_custom_call.1} parent=5 // pred_check
      _
    $region10: #{tpu_custom_call.1} parent=5 // pred_check_branch
      %116 = sbr.rel (%p113) target = $region12
    $region11: #{tpu_custom_call.1} parent=5 // pred_region
      %s117 = ssub.s32 %s9, 1
      // Predicated region
      $region13: #{tpu_custom_call.1} parent=11 // pred_check
        %p118 = pneg %p56
      $region14: #{tpu_custom_call.1} parent=11 // pred_check_branch
        %120 = sbr.rel (%p118) target = $region16
      $region15: #{tpu_custom_call.1} parent=11 // pred_region
        _
      $region16: #{tpu_custom_call.1} parent=11 // pred_fallthru
        _
      // Predicated region
      $region17: #{tpu_custom_call.1} parent=11 // pred_check
        %p121 = pneg %p77
      $region18: #{tpu_custom_call.1} parent=11 // pred_check_branch
        %123 = sbr.rel (%p121) target = $region20
      $region19: #{tpu_custom_call.1} parent=11 // pred_region
        _
      $region20: #{tpu_custom_call.1} parent=11 // pred_fallthru
        _
    $region12: #{tpu_custom_call.1} parent=5 // pred_fallthru
      _
    %p124 = scmp.lt.s32.totalorder %s9, 2
    // Predicated region
    $region21: #{tpu_custom_call.1} parent=5 // pred_check
      %p125 = pneg %p124
    $region22: #{tpu_custom_call.1} parent=5 // pred_check_branch
      %127 = sbr.rel (%p125) target = $region24
    $region23: #{tpu_custom_call.1} parent=5 // pred_region
      // Predicated region
      $region25: #{tpu_custom_call.1} parent=23 // pred_check
        %p128 = pneg %p29
      $region26: #{tpu_custom_call.1} parent=23 // pred_check_branch
        %130 = sbr.rel (%p128) target = $region28
      $region27: #{tpu_custom_call.1} parent=23 // pred_region
        %p131 = scmp.lt.s32.totalorder %s9, 1
        %s132 = scalar_select %p131, %s9, 1
        %s133 = smul.addr %s132, 4
        %s134 = smul.addr %s133, 8
        %s135 = scalar_lea.vmem %s0, %s134
      $region28: #{tpu_custom_call.1} parent=23 // pred_fallthru
        _
    $region24: #{tpu_custom_call.1} parent=5 // pred_fallthru
      _
    %p136 = scmp.le.s32.totalorder 1, %s9
    %p137 = scmp.lt.s32.totalorder %s9, 3
    %p138 = pnand %p136, %p137
    %p139 = pneg %p138
    // Predicated region
    $region29: #{tpu_custom_call.1} parent=5 // pred_check
      _
    $region30: #{tpu_custom_call.1} parent=5 // pred_check_branch
      %141 = sbr.rel (%p138) target = $region32
    $region31: #{tpu_custom_call.1} parent=5 // pred_region
      %s142 = ssub.s32 %s9, 1
      %p143 = scmp.lt.s32.totalorder %s14, 1
      %s144 = scalar_select %p143, %s14, 1
      %s145 = smul.addr %s144, 4
      %s146 = smul.addr %s145, 8
      %s147 = scalar_lea.vmem %s0, %s146
      %p148 = pneg %p35
      %p149 = pneg %p32
      %p150 = pneg %p56
      %p151 = pneg %p53
      %p152 = pneg %p77
      %p153 = pneg %p74
      %p154 = pneg %p103
      %p155 = pneg %p100
      %p156 = scmp.lt.s32.totalorder %s14, 1
      %s157 = scalar_select %p156, %s14, 1
      %s158 = smul.addr %s157, 8
      %s159 = smul.addr %s158, 8
      %s160 = scalar_lea.vmem %s3, %s159
      %p161 = scmp.lt.s32.totalorder %s14, 1
      %s162 = scalar_select %p161, %s14, 1
      %s163 = smul.addr %s162, 4
      %s164 = smul.addr %s163, 8
      %s165 = scalar_lea.vmem %s0, %s164
      %p166 = scmp.lt.s32.totalorder %s14, 1
      %s167 = scalar_select %p166, %s14, 1
      %s168 = smul.addr %s167, 8
      %s169 = smul.addr %s168, 8
      %s170 = scalar_lea.vmem %s3, %s169
      %v171 = vld [vmem:[%s165] sm:$0xff]
      %v172 = vld [vmem:[%s165 + $0x8] sm:$0xff]
      %v173 = vld [vmem:[%s165 + $0x10] sm:$0xff]
      %v174 = vld [vmem:[%s165 + $0x18] sm:$0xff]
      %v175 = vld [vmem:[%s1] sm:$0xff]
      %vm176 = vcmask 64512
      %v178 = vsel %vm176, %v171, 0
      %v181 = vsel %vm176, %v172, 0
      %v184 = vsel %vm176, %v173, 0
      %v187 = vsel %vm176, %v174, 0
      %189 = vmatprep.subr.mxu0 0.0
      %190 = vmatpush1.msra.mxu0 0.0
      %191 = vmatprep.subr.mxu0 0.0
      %192 = vmatpush1.msra.mxu0 0.0
      %193 = vmatprep.subr.mxu0 0.0
      %194 = vmatpush1.msra.mxu0 0.0
      %195 = vmatprep.subr.mxu0 0.0
      %196 = vmatpush1.msra.mxu0 0.0
      %197 = vmatprep.subr.mxu0 0.0
      %198 = vmatpush1.msra.mxu0 0.0
      %199 = vmatprep.subr.mxu0 0.0
      %200 = vmatpush1.msra.mxu0 0.0
      %201 = vmatprep.subr.mxu0 0.0
      %202 = vmatpush1.msra.mxu0 0.0
      %203 = vmatprep.subr.mxu0 0.0
      %204 = vmatpush1.msra.mxu0 0.0
      %205 = vmatprep.subr.mxu0 0.0
      %206 = vmatpush1.msra.mxu0 0.0
      %207 = vmatprep.subr.mxu0 0.0
      %208 = vmatpush1.msra.mxu0 0.0
      %209 = vmatprep.subr.mxu0 0.0
      %210 = vmatpush1.msra.mxu0 0.0
      %211 = vmatprep.subr.mxu0 0.0
      %212 = vmatpush1.msra.mxu0 0.0
      %213 = vmatprep.subr.mxu0 0.0
      %214 = vmatpush1.msra.mxu0 0.0
      %215 = vmatprep.subr.mxu0 0.0
      %216 = vmatpush1.msra.mxu0 0.0
      %217 = vmatprep.subr.mxu0 0.0
      %218 = vmatpush1.msra.mxu0 0.0
      %219 = vmatprep.subr.mxu0 0.0
      %220 = vmatpush1.msra.mxu0 %v175
      %221 = vmatprep.subr.mxu0 0.0
      %222 = vmatpush2.msra.mxu0 0.0
      %223 = vmatprep.subr.mxu0 0.0
      %224 = vmatpush2.msra.mxu0 0.0
      %225 = vmatprep.subr.mxu0 0.0
      %226 = vmatpush2.msra.mxu0 0.0
      %227 = vmatprep.subr.mxu0 0.0
      %228 = vmatpush2.msra.mxu0 0.0
      %229 = vmatprep.subr.mxu0 0.0
      %230 = vmatpush2.msra.mxu0 0.0
      %231 = vmatprep.subr.mxu0 0.0
      %232 = vmatpush2.msra.mxu0 0.0
      %233 = vmatprep.subr.mxu0 0.0
      %234 = vmatpush2.msra.mxu0 0.0
      %235 = vmatprep.subr.mxu0 0.0
      %236 = vmatpush2.msra.mxu0 0.0
      %237 = vmatprep.subr.mxu0 0.0
      %238 = vmatpush2.msra.mxu0 0.0
      %239 = vmatprep.subr.mxu0 0.0
      %240 = vmatpush2.msra.mxu0 0.0
      %241 = vmatprep.subr.mxu0 0.0
      %242 = vmatpush2.msra.mxu0 0.0
      %243 = vmatprep.subr.mxu0 0.0
      %244 = vmatpush2.msra.mxu0 0.0
      %245 = vmatprep.subr.mxu0 0.0
      %246 = vmatpush2.msra.mxu0 0.0
      %247 = vmatprep.subr.mxu0 0.0
      %248 = vmatpush2.msra.mxu0 0.0
      %249 = vmatprep.subr.mxu0 0.0
      %250 = vmatpush2.msra.mxu0 0.0
      %251 = vmatprep.subr.mxu0 0.0
      %252 = vmatpush2.msra.mxu0 0.0
      %253 = vmatprep.mubr.f32.mxu0 0.0
      %254 = vmatmul.mubr.f32.gmra.mxu0 %v178
      %v255 = vpop.f32.mrf.mxu0
      %v256 = vadd.f32 0.0, %v255
      %v257 = vpop.f32.mrf.mxu0
      %258 = vmatprep.mubr.f32.mxu0 0.0
      %259 = vmatmul.mubr.f32.gmra.mxu0 %v181
      %v260 = vpop.f32.mrf.mxu0
      %v261 = vadd.f32 0.0, %v260
      %v262 = vpop.f32.mrf.mxu0
      %263 = vmatprep.mubr.f32.mxu0 0.0
      %264 = vmatmul.mubr.f32.gmra.mxu0 %v184
      %v265 = vpop.f32.mrf.mxu0
      %v266 = vadd.f32 0.0, %v265
      %v267 = vpop.f32.mrf.mxu0
      %268 = vmatprep.mubr.f32.mxu0 0.0
      %269 = vmatmul.mubr.f32.gmra.mxu0 %v187
      %v270 = vpop.f32.mrf.mxu0
      %v271 = vadd.f32 0.0, %v270
      %v272 = vpop.f32.mrf.mxu0
      %273 = vdwg.mxu0
      %v274 = vld [vmem:[%s2] sm:$0xff]
      %v275 = vld [vmem:[%s2 + $0x8] sm:$0xff]
      %v277 = vsel %vm176, %v274, 0
      %v280 = vsel %vm176, %v275, 0
      %282 = vmatprep.subr.mxu0 0.0
      %283 = vmatpush1.msra.mxu0 0.0
      %284 = vmatprep.subr.mxu0 0.0
      %285 = vmatpush1.msra.mxu0 0.0
      %286 = vmatprep.subr.mxu0 0.0
      %287 = vmatpush1.msra.mxu0 0.0
      %288 = vmatprep.subr.mxu0 0.0
      %289 = vmatpush1.msra.mxu0 0.0
      %290 = vmatprep.subr.mxu0 0.0
      %291 = vmatpush1.msra.mxu0 0.0
      %292 = vmatprep.subr.mxu0 0.0
      %293 = vmatpush1.msra.mxu0 0.0
      %294 = vmatprep.subr.mxu0 0.0
      %295 = vmatpush1.msra.mxu0 0.0
      %296 = vmatprep.subr.mxu0 0.0
      %297 = vmatpush1.msra.mxu0 0.0
      %298 = vmatprep.subr.mxu0 0.0
      %299 = vmatpush1.msra.mxu0 0.0
      %300 = vmatprep.subr.mxu0 0.0
      %301 = vmatpush1.msra.mxu0 0.0
      %302 = vmatprep.subr.mxu0 0.0
      %303 = vmatpush1.msra.mxu0 0.0
      %304 = vmatprep.subr.mxu0 0.0
      %305 = vmatpush1.msra.mxu0 0.0
      %306 = vmatprep.subr.mxu0 0.0
      %307 = vmatpush1.msra.mxu0 0.0
      %308 = vmatprep.subr.mxu0 0.0
      %309 = vmatpush1.msra.mxu0 0.0
      %310 = vmatprep.subr.mxu0 0.0
      %311 = vmatpush1.msra.mxu0 0.0
      %312 = vmatprep.subr.mxu0 0.0
      %313 = vmatpush1.msra.mxu0 %v256
      %314 = vmatprep.subr.mxu0 0.0
      %315 = vmatpush2.msra.mxu0 0.0
      %316 = vmatprep.subr.mxu0 0.0
      %317 = vmatpush2.msra.mxu0 0.0
      %318 = vmatprep.subr.mxu0 0.0
      %319 = vmatpush2.msra.mxu0 0.0
      %320 = vmatprep.subr.mxu0 0.0
      %321 = vmatpush2.msra.mxu0 0.0
      %322 = vmatprep.subr.mxu0 0.0
      %323 = vmatpush2.msra.mxu0 0.0
      %324 = vmatprep.subr.mxu0 0.0
      %325 = vmatpush2.msra.mxu0 0.0
      %326 = vmatprep.subr.mxu0 0.0
      %327 = vmatpush2.msra.mxu0 0.0
      %328 = vmatprep.subr.mxu0 0.0
      %329 = vmatpush2.msra.mxu0 0.0
      %330 = vmatprep.subr.mxu0 0.0
      %331 = vmatpush2.msra.mxu0 0.0
      %332 = vmatprep.subr.mxu0 0.0
      %333 = vmatpush2.msra.mxu0 0.0
      %334 = vmatprep.subr.mxu0 0.0
      %335 = vmatpush2.msra.mxu0 0.0
      %336 = vmatprep.subr.mxu0 0.0
      %337 = vmatpush2.msra.mxu0 0.0
      %338 = vmatprep.subr.mxu0 0.0
      %339 = vmatpush2.msra.mxu0 0.0
      %340 = vmatprep.subr.mxu0 0.0
      %341 = vmatpush2.msra.mxu0 0.0
      %342 = vmatprep.subr.mxu0 0.0
      %343 = vmatpush2.msra.mxu0 0.0
      %344 = vmatprep.subr.mxu0 0.0
      %345 = vmatpush2.msra.mxu0 0.0
      %346 = vmatprep.mubr.f32.mxu0 0.0
      %347 = vmatmul.mubr.f32.gmra.mxu0 %v277
      %v348 = vpop.f32.mrf.mxu0
      %v349 = vadd.f32 0.0, %v348
      %v350 = vpop.f32.mrf.mxu0
      %351 = vmatprep.mubr.f32.mxu0 0.0
      %352 = vmatmul.mubr.f32.gmra.mxu0 %v280
      %v353 = vpop.f32.mrf.mxu0
      %v354 = vadd.f32 0.0, %v353
      %v355 = vpop.f32.mrf.mxu0
      %356 = vdwg.mxu0
      %vm357 = vcmask 130048
      %358 = vst.msk [vmem:[%s170] sm:$0xff] %vm357, %v349
      %359 = vst.msk [vmem:[%s170 + $0x8] sm:$0xff] %vm357, %v354
      %360 = vmatprep.subr.mxu0 0.0
      %361 = vmatpush1.msra.mxu0 0.0
      %362 = vmatprep.subr.mxu0 0.0
      %363 = vmatpush1.msra.mxu0 0.0
      %364 = vmatprep.subr.mxu0 0.0
      %365 = vmatpush1.msra.mxu0 0.0
      %366 = vmatprep.subr.mxu0 0.0
      %367 = vmatpush1.msra.mxu0 0.0
      %368 = vmatprep.subr.mxu0 0.0
      %369 = vmatpush1.msra.mxu0 0.0
      %370 = vmatprep.subr.mxu0 0.0
      %371 = vmatpush1.msra.mxu0 0.0
      %372 = vmatprep.subr.mxu0 0.0
      %373 = vmatpush1.msra.mxu0 0.0
      %374 = vmatprep.subr.mxu0 0.0
      %375 = vmatpush1.msra.mxu0 0.0
      %376 = vmatprep.subr.mxu0 0.0
      %377 = vmatpush1.msra.mxu0 0.0
      %378 = vmatprep.subr.mxu0 0.0
      %379 = vmatpush1.msra.mxu0 0.0
      %380 = vmatprep.subr.mxu0 0.0
      %381 = vmatpush1.msra.mxu0 0.0
      %382 = vmatprep.subr.mxu0 0.0
      %383 = vmatpush1.msra.mxu0 0.0
      %384 = vmatprep.subr.mxu0 0.0
      %385 = vmatpush1.msra.mxu0 0.0
      %386 = vmatprep.subr.mxu0 0.0
      %387 = vmatpush1.msra.mxu0 0.0
      %388 = vmatprep.subr.mxu0 0.0
      %389 = vmatpush1.msra.mxu0 0.0
      %390 = vmatprep.subr.mxu0 0.0
      %391 = vmatpush1.msra.mxu0 %v261
      %392 = vmatprep.subr.mxu0 0.0
      %393 = vmatpush2.msra.mxu0 0.0
      %394 = vmatprep.subr.mxu0 0.0
      %395 = vmatpush2.msra.mxu0 0.0
      %396 = vmatprep.subr.mxu0 0.0
      %397 = vmatpush2.msra.mxu0 0.0
      %398 = vmatprep.subr.mxu0 0.0
      %399 = vmatpush2.msra.mxu0 0.0
      %400 = vmatprep.subr.mxu0 0.0
      %401 = vmatpush2.msra.mxu0 0.0
      %402 = vmatprep.subr.mxu0 0.0
      %403 = vmatpush2.msra.mxu0 0.0
      %404 = vmatprep.subr.mxu0 0.0
      %405 = vmatpush2.msra.mxu0 0.0
      %406 = vmatprep.subr.mxu0 0.0
      %407 = vmatpush2.msra.mxu0 0.0
      %408 = vmatprep.subr.mxu0 0.0
      %409 = vmatpush2.msra.mxu0 0.0
      %410 = vmatprep.subr.mxu0 0.0
      %411 = vmatpush2.msra.mxu0 0.0
      %412 = vmatprep.subr.mxu0 0.0
      %413 = vmatpush2.msra.mxu0 0.0
      %414 = vmatprep.subr.mxu0 0.0
      %415 = vmatpush2.msra.mxu0 0.0
      %416 = vmatprep.subr.mxu0 0.0
      %417 = vmatpush2.msra.mxu0 0.0
      %418 = vmatprep.subr.mxu0 0.0
      %419 = vmatpush2.msra.mxu0 0.0
      %420 = vmatprep.subr.mxu0 0.0
      %421 = vmatpush2.msra.mxu0 0.0
      %422 = vmatprep.subr.mxu0 0.0
      %423 = vmatpush2.msra.mxu0 0.0
      %424 = vmatprep.mubr.f32.mxu0 0.0
      %425 = vmatmul.mubr.f32.gmra.mxu0 %v277
      %v426 = vpop.f32.mrf.mxu0
      %v427 = vadd.f32 0.0, %v426
      %v428 = vpop.f32.mrf.mxu0
      %429 = vmatprep.mubr.f32.mxu0 0.0
      %430 = vmatmul.mubr.f32.gmra.mxu0 %v280
      %v431 = vpop.f32.mrf.mxu0
      %v432 = vadd.f32 0.0, %v431
      %v433 = vpop.f32.mrf.mxu0
      %434 = vdwg.mxu0
      %435 = vst.msk [vmem:[%s170 + $0x10] sm:$0xff] %vm357, %v427
      %436 = vst.msk [vmem:[%s170 + $0x18] sm:$0xff] %vm357, %v432
      %437 = vmatprep.subr.mxu0 0.0
      %438 = vmatpush1.msra.mxu0 0.0
      %439 = vmatprep.subr.mxu0 0.0
      %440 = vmatpush1.msra.mxu0 0.0
      %441 = vmatprep.subr.mxu0 0.0
      %442 = vmatpush1.msra.mxu0 0.0
      %443 = vmatprep.subr.mxu0 0.0
      %444 = vmatpush1.msra.mxu0 0.0
      %445 = vmatprep.subr.mxu0 0.0
      %446 = vmatpush1.msra.mxu0 0.0
      %447 = vmatprep.subr.mxu0 0.0
      %448 = vmatpush1.msra.mxu0 0.0
      %449 = vmatprep.subr.mxu0 0.0
      %450 = vmatpush1.msra.mxu0 0.0
      %451 = vmatprep.subr.mxu0 0.0
      %452 = vmatpush1.msra.mxu0 0.0
      %453 = vmatprep.subr.mxu0 0.0
      %454 = vmatpush1.msra.mxu0 0.0
      %455 = vmatprep.subr.mxu0 0.0
      %456 = vmatpush1.msra.mxu0 0.0
      %457 = vmatprep.subr.mxu0 0.0
      %458 = vmatpush1.msra.mxu0 0.0
      %459 = vmatprep.subr.mxu0 0.0
      %460 = vmatpush1.msra.mxu0 0.0
      %461 = vmatprep.subr.mxu0 0.0
      %462 = vmatpush1.msra.mxu0 0.0
      %463 = vmatprep.subr.mxu0 0.0
      %464 = vmatpush1.msra.mxu0 0.0
      %465 = vmatprep.subr.mxu0 0.0
      %466 = vmatpush1.msra.mxu0 0.0
      %467 = vmatprep.subr.mxu0 0.0
      %468 = vmatpush1.msra.mxu0 %v266
      %469 = vmatprep.subr.mxu0 0.0
      %470 = vmatpush2.msra.mxu0 0.0
      %471 = vmatprep.subr.mxu0 0.0
      %472 = vmatpush2.msra.mxu0 0.0
      %473 = vmatprep.subr.mxu0 0.0
      %474 = vmatpush2.msra.mxu0 0.0
      %475 = vmatprep.subr.mxu0 0.0
      %476 = vmatpush2.msra.mxu0 0.0
      %477 = vmatprep.subr.mxu0 0.0
      %478 = vmatpush2.msra.mxu0 0.0
      %479 = vmatprep.subr.mxu0 0.0
      %480 = vmatpush2.msra.mxu0 0.0
      %481 = vmatprep.subr.mxu0 0.0
      %482 = vmatpush2.msra.mxu0 0.0
      %483 = vmatprep.subr.mxu0 0.0
      %484 = vmatpush2.msra.mxu0 0.0
      %485 = vmatprep.subr.mxu0 0.0
      %486 = vmatpush2.msra.mxu0 0.0
      %487 = vmatprep.subr.mxu0 0.0
      %488 = vmatpush2.msra.mxu0 0.0
      %489 = vmatprep.subr.mxu0 0.0
      %490 = vmatpush2.msra.mxu0 0.0
      %491 = vmatprep.subr.mxu0 0.0
      %492 = vmatpush2.msra.mxu0 0.0
      %493 = vmatprep.subr.mxu0 0.0
      %494 = vmatpush2.msra.mxu0 0.0
      %495 = vmatprep.subr.mxu0 0.0
      %496 = vmatpush2.msra.mxu0 0.0
      %497 = vmatprep.subr.mxu0 0.0
      %498 = vmatpush2.msra.mxu0 0.0
      %499 = vmatprep.subr.mxu0 0.0
      %500 = vmatpush2.msra.mxu0 0.0
      %501 = vmatprep.mubr.f32.mxu0 0.0
      %502 = vmatmul.mubr.f32.gmra.mxu0 %v277
      %v503 = vpop.f32.mrf.mxu0
      %v504 = vadd.f32 0.0, %v503
      %v505 = vpop.f32.mrf.mxu0
      %506 = vmatprep.mubr.f32.mxu0 0.0
      %507 = vmatmul.mubr.f32.gmra.mxu0 %v280
      %v508 = vpop.f32.mrf.mxu0
      %v509 = vadd.f32 0.0, %v508
      %v510 = vpop.f32.mrf.mxu0
      %511 = vdwg.mxu0
      %512 = vst.msk [vmem:[%s170 + $0x20] sm:$0xff] %vm357, %v504
      %513 = vst.msk [vmem:[%s170 + $0x28] sm:$0xff] %vm357, %v509
      %514 = vmatprep.subr.mxu0 0.0
      %515 = vmatpush1.msra.mxu0 0.0
      %516 = vmatprep.subr.mxu0 0.0
      %517 = vmatpush1.msra.mxu0 0.0
      %518 = vmatprep.subr.mxu0 0.0
      %519 = vmatpush1.msra.mxu0 0.0
      %520 = vmatprep.subr.mxu0 0.0
      %521 = vmatpush1.msra.mxu0 0.0
      %522 = vmatprep.subr.mxu0 0.0
      %523 = vmatpush1.msra.mxu0 0.0
      %524 = vmatprep.subr.mxu0 0.0
      %525 = vmatpush1.msra.mxu0 0.0
      %526 = vmatprep.subr.mxu0 0.0
      %527 = vmatpush1.msra.mxu0 0.0
      %528 = vmatprep.subr.mxu0 0.0
      %529 = vmatpush1.msra.mxu0 0.0
      %530 = vmatprep.subr.mxu0 0.0
      %531 = vmatpush1.msra.mxu0 0.0
      %532 = vmatprep.subr.mxu0 0.0
      %533 = vmatpush1.msra.mxu0 0.0
      %534 = vmatprep.subr.mxu0 0.0
      %535 = vmatpush1.msra.mxu0 0.0
      %536 = vmatprep.subr.mxu0 0.0
      %537 = vmatpush1.msra.mxu0 0.0
      %538 = vmatprep.subr.mxu0 0.0
      %539 = vmatpush1.msra.mxu0 0.0
      %540 = vmatprep.subr.mxu0 0.0
      %541 = vmatpush1.msra.mxu0 0.0
      %542 = vmatprep.subr.mxu0 0.0
      %543 = vmatpush1.msra.mxu0 0.0
      %544 = vmatprep.subr.mxu0 0.0
      %545 = vmatpush1.msra.mxu0 %v271
      %546 = vmatprep.subr.mxu0 0.0
      %547 = vmatpush2.msra.mxu0 0.0
      %548 = vmatprep.subr.mxu0 0.0
      %549 = vmatpush2.msra.mxu0 0.0
      %550 = vmatprep.subr.mxu0 0.0
      %551 = vmatpush2.msra.mxu0 0.0
      %552 = vmatprep.subr.mxu0 0.0
      %553 = vmatpush2.msra.mxu0 0.0
      %554 = vmatprep.subr.mxu0 0.0
      %555 = vmatpush2.msra.mxu0 0.0
      %556 = vmatprep.subr.mxu0 0.0
      %557 = vmatpush2.msra.mxu0 0.0
      %558 = vmatprep.subr.mxu0 0.0
      %559 = vmatpush2.msra.mxu0 0.0
      %560 = vmatprep.subr.mxu0 0.0
      %561 = vmatpush2.msra.mxu0 0.0
      %562 = vmatprep.subr.mxu0 0.0
      %563 = vmatpush2.msra.mxu0 0.0
      %564 = vmatprep.subr.mxu0 0.0
      %565 = vmatpush2.msra.mxu0 0.0
      %566 = vmatprep.subr.mxu0 0.0
      %567 = vmatpush2.msra.mxu0 0.0
      %568 = vmatprep.subr.mxu0 0.0
      %569 = vmatpush2.msra.mxu0 0.0
      %570 = vmatprep.subr.mxu0 0.0
      %571 = vmatpush2.msra.mxu0 0.0
      %572 = vmatprep.subr.mxu0 0.0
      %573 = vmatpush2.msra.mxu0 0.0
      %574 = vmatprep.subr.mxu0 0.0
      %575 = vmatpush2.msra.mxu0 0.0
      %576 = vmatprep.subr.mxu0 0.0
      %577 = vmatpush2.msra.mxu0 0.0
      %578 = vmatprep.mubr.f32.mxu0 0.0
      %579 = vmatmul.mubr.f32.gmra.mxu0 %v277
      %v580 = vpop.f32.mrf.mxu0
      %v581 = vadd.f32 0.0, %v580
      %v582 = vpop.f32.mrf.mxu0
      %583 = vmatprep.mubr.f32.mxu0 0.0
      %584 = vmatmul.mubr.f32.gmra.mxu0 %v280
      %v585 = vpop.f32.mrf.mxu0
      %v586 = vadd.f32 0.0, %v585
      %v587 = vpop.f32.mrf.mxu0
      %588 = vdwg.mxu0
      %589 = vst.msk [vmem:[%s170 + $0x30] sm:$0xff] %vm357, %v581
      %590 = vst.msk [vmem:[%s170 + $0x38] sm:$0xff] %vm357, %v586
      %p591 = scmp.lt.s32.totalorder %s14, 1
      %s592 = scalar_select %p591, %s14, 1
      %s593 = smul.addr %s592, 8
      %s594 = smul.addr %s593, 8
      %s595 = scalar_lea.vmem %s3, %s594
      // Predicated region
      $region33: #{tpu_custom_call.1} parent=31 // pred_check
        %p596 = pneg %p100
      $region34: #{tpu_custom_call.1} parent=31 // pred_check_branch
        %598 = sbr.rel (%p596) target = $region36
      $region35: #{tpu_custom_call.1} parent=31 // pred_region
        _
      $region36: #{tpu_custom_call.1} parent=31 // pred_fallthru
        _
    $region32: #{tpu_custom_call.1} parent=5 // pred_fallthru
      _
    %p599 = scmp.le.s32.totalorder 2, %s9
    // Predicated region
    $region37: #{tpu_custom_call.1} parent=5 // pred_check
      %p600 = pneg %p599
    $region38: #{tpu_custom_call.1} parent=5 // pred_check_branch
      %602 = sbr.rel (%p600) target = $region40
    $region39: #{tpu_custom_call.1} parent=5 // pred_region
      %s603 = ssub.s32 %s9, 2
      // Predicated region
      $region41: #{tpu_custom_call.1} parent=39 // pred_check
        %p604 = pneg %p106
      $region42: #{tpu_custom_call.1} parent=39 // pred_check_branch
        %606 = sbr.rel (%p604) target = $region44
      $region43: #{tpu_custom_call.1} parent=39 // pred_region
        %p607 = scmp.lt.s32.totalorder %s15, 1
        %s608 = scalar_select %p607, %s15, 1
        %s609 = smul.addr %s608, 8
        %s610 = smul.addr %s609, 8
        %s611 = scalar_lea.vmem %s3, %s610
      $region44: #{tpu_custom_call.1} parent=39 // pred_fallthru
        _
    $region40: #{tpu_custom_call.1} parent=5 // pred_fallthru
      _
  $region6: #{tpu_custom_call.1} parent=0 // loop_footer
    %s13 = sadd.s32 1, %s9
  $region7: #{tpu_custom_call.1} parent=0 // loop_footer_branch
    %8 = sbr.rel target = $region3
  $region8: #{tpu_custom_call.1} parent=0 // loop_exit
    _

</llo_original>
